<compile_context>
chip_gen: v5e
topology: v5e:2x2
jax: 0.10.0
libtpu: 0.0.40
codegen_flags: <defaults>
</compile_context>

<pallas_src>
import functools
import math

import jax
import jax.numpy as jnp
from jax import lax
from jax.experimental import pallas as pl
from jax.experimental.pallas import tpu as pltpu

MIN_NORM = 1e-15
EPS_F32 = 4e-3          # HGCN PoincareBall eps for float32


def _artanh(x):
    # HGCN's Artanh: clamp to open interval (-1, 1) then 0.5 * log((1+x)/(1-x)).
    # NOTE: kept bit-identical to the reference; 1 - 1e-15 rounds to 1.0 in f32,
    # so points on/outside the ball boundary would still produce inf (same as ref).
    xc = jnp.clip(x, -1.0 + MIN_NORM, 1.0 - MIN_NORM)
    return 0.5 * (jnp.log1p(xc) - jnp.log1p(-xc))


# ----------------------------------------------------------------------------
# Kernel 1: logmap0 (tangent map at the origin), row-tiled.
# ----------------------------------------------------------------------------
def _logmap0_kernel(x_ref, xt_ref, *, sqrt_c):
    x = x_ref[...].astype(jnp.float32)                       # [TR, D]
    norm_sq = jnp.sum(x * x, axis=-1, keepdims=True)
    inv_norm = lax.rsqrt(jnp.maximum(norm_sq, MIN_NORM * MIN_NORM))
    norm = norm_sq * inv_norm
    scale = _artanh(sqrt_c * norm) * (inv_norm / sqrt_c)
    xt_ref[...] = (scale * x).astype(xt_ref.dtype)


# ----------------------------------------------------------------------------
# Kernel 2: streamed aggregation + expmap0 + proj.
#   grid = (row tiles, K tiles); acc_ref is a persistent f32 VMEM accumulator.
# ----------------------------------------------------------------------------
def _agg_kernel(adj_ref, xt_ref, out_ref, acc_ref, *,
                sqrt_c, matmul_dtype, tk, xt_resident):
    k = pl.program_id(1)

    adj_tile = adj_ref[...]                                   # [TM, TK], streamed
    if adj_tile.dtype != matmul_dtype:
        # In-kernel cast: avoids a full N^2 read+write cast pass in HBM.
        adj_tile = adj_tile.astype(matmul_dtype)

    if xt_resident:
        start = pl.multiple_of(k * tk, tk)
        xt_tile = xt_ref[pl.ds(start, tk), :]                 # slice of resident xt
    else:
        xt_tile = xt_ref[...]

    partial = jnp.dot(adj_tile, xt_tile, preferred_element_type=jnp.float32)

    @pl.when(k == 0)
    def _():
        acc_ref[...] = partial          # fold init into first step (no zero pass)

    @pl.when(k != 0)
    def _():
        acc_ref[...] += partial

    @pl.when(k == pl.num_programs(1) - 1)
    def _():
        support = acc_ref[...]                                # [TM, D] f32
        # expmap0(support, c)
        u_sq = jnp.sum(support * support, axis=-1, keepdims=True)
        inv_u = lax.rsqrt(jnp.maximum(u_sq, MIN_NORM * MIN_NORM))
        u_norm = u_sq * inv_u
        gamma = (jnp.tanh(sqrt_c * u_norm) * (inv_u / sqrt_c)) * support
        # proj(gamma, c): scale down only if the norm exceeds the ball radius.
        g_sq = jnp.sum(gamma * gamma, axis=-1, keepdims=True)
        inv_g = lax.rsqrt(jnp.maximum(g_sq, MIN_NORM * MIN_NORM))
        maxnorm = (1.0 - EPS_F32) / sqrt_c
        out_ref[...] = (gamma * jnp.minimum(1.0, maxnorm * inv_g)).astype(out_ref.dtype)


# ----------------------------------------------------------------------------
# Tiling / planning helpers
# ----------------------------------------------------------------------------
def _pick_tile(n, target, align):
    """Largest multiple of `align` <= target that divides n, else full n."""
    if n <= target or n <= align:
        return n
    t = (min(target, n) // align) * align
    while t >= align:
        if n % t == 0:
            return t
        t -= align
    return n


def _sublane(itemsize):
    # Sub-32-bit dtypes pack along sublanes: native tiles (8,128)/(16,128)/(32,128).
    return {4: 8, 2: 16, 1: 32}.get(int(itemsize), 8)


def _vmem_capacity_bytes():
    try:
        info = pltpu.get_tpu_info()
        cap = getattr(info, "vmem_capacity_bytes", None)
        if cap:
            return int(cap)
    except Exception:
        pass
    return 64 << 20   # conservative fallback (v7x per-TC)


def _plan(N, D, tm, tk, adj_bytes, xt_bytes, out_bytes):
    """Returns (vmem_need_bytes, adj_buffer_count, xt_resident)."""
    n_k = max(1, N // tk)
    adj_tile_bytes = tm * tk * adj_bytes
    bufs = 3 if (n_k >= 3 and adj_tile_bytes < (4 << 20)) else 2
    xt_resident = (N * D * xt_bytes) <= (4 << 20)
    xt_vmem = N * D * xt_bytes if xt_resident else 2 * tk * D * xt_bytes
    need = (bufs * adj_tile_bytes + xt_vmem
            + 2 * tm * D * out_bytes        # double-buffered output block
            + tm * D * 4)                   # f32 accumulator
    return need, bufs, xt_resident


# ----------------------------------------------------------------------------
# Wrappers
# ----------------------------------------------------------------------------
def poincare_logmap0(x, *, c=1.0, out_dtype=None):
    N, D = x.shape
    out_dtype = jnp.dtype(out_dtype or x.dtype)
    align = _sublane(min(jnp.dtype(x.dtype).itemsize, out_dtype.itemsize))
    tr = _pick_tile(N, 1024, align)
    kern = functools.partial(_logmap0_kernel, sqrt_c=float(math.sqrt(c)))
    return pl.pallas_call(
        kern,
        out_shape=jax.ShapeDtypeStruct((N, D), out_dtype),
        grid_spec=pltpu.PrefetchScalarGridSpec(
            num_scalar_prefetch=0,
            grid=(N // tr,),
            in_specs=[pl.BlockSpec((tr, D), lambda i: (i, 0))],
            out_specs=pl.BlockSpec((tr, D), lambda i: (i, 0)),
        ),
        compiler_params=pltpu.CompilerParams(
            dimension_semantics=("parallel",)),
    )(x)


def hyp_agg(x, adj, *, c=1.0, matmul_dtype=jnp.bfloat16, tm=None, tk=None):
    """HypAgg forward (use_att=False): proj(expmap0(adj @ logmap0(x, c), c), c).

    x:   [N, D] float32 node features (points on the Poincare ball)
    adj: [N, N] dense (row-normalized) adjacency; streamed in its OWN dtype.
         Pass a pre-cast bf16 adjacency to halve the dominant HBM stream when
         the adjacency is reused across layers/steps; an f32 adjacency is cast
         to `matmul_dtype` per tile inside the kernel (no extra HBM pass).
    """
    N, D = x.shape
    assert adj.shape == (N, N)

    adj_bytes = jnp.dtype(adj.dtype).itemsize
    xt_dtype = jnp.dtype(matmul_dtype)
    xt_bytes = xt_dtype.itemsize
    out_dtype = jnp.dtype(x.dtype)
    out_bytes = out_dtype.itemsize

    # logmap0 once (hoisted out of the K reduction); emit in the matmul dtype.
    xt = poincare_logmap0(x.astype(jnp.float32), c=c, out_dtype=xt_dtype)

    sublane = _sublane(adj_bytes)
    vmem_cap = _vmem_capacity_bytes()
    budget = min(int(0.4 * vmem_cap), 48 << 20)   # byte-budget guard (v7x-safe)

    if tm is None:
        # Megacore: cap tm at N//2 so the "parallel" row axis has >=2 tiles.
        tm_target = max(sublane, min(512, N // 2)) if N >= 2 * sublane else N
        tm = _pick_tile(N, tm_target, sublane)
    if tk is None:
        tk = _pick_tile(N, 4096 if adj_bytes <= 2 else 2048, 128)
        for _ in range(16):
            need, _, _ = _plan(N, D, tm, tk, adj_bytes, xt_bytes, out_bytes)
            if need <= budget:
                break
            new_tk = _pick_tile(N, max(128, tk // 2), 128)
            if new_tk < tk:
                tk = new_tk
                continue
            new_tm = _pick_tile(N, max(sublane, tm // 2), sublane)
            if new_tm < tm:
                tm = new_tm
                continue
            break   # cannot shrink further (no aligned divisors); accept

    assert N % tm == 0 and N % tk == 0, "tm/tk must divide N"
    need, bufs, xt_resident = _plan(N, D, tm, tk, adj_bytes, xt_bytes, out_bytes)
    grid = (N // tm, N // tk)
    adj_pipeline = pl.Buffered(3) if bufs == 3 else None
    vmem_limit = int(min(max(2 * need, 32 << 20),
                         max(32 << 20, int(0.75 * vmem_cap))))

    if xt_resident:
        # xt DMA'd once, stays resident in VMEM across the whole grid.
        xt_spec = pl.BlockSpec((N, D), lambda i, k: (0, 0))
    else:
        xt_spec = pl.BlockSpec((tk, D), lambda i, k: (k, 0))

    kern = functools.partial(_agg_kernel, sqrt_c=float(math.sqrt(c)),
                             matmul_dtype=xt_dtype, tk=tk, xt_resident=xt_resident)
    return pl.pallas_call(
        kern,
        out_shape=jax.ShapeDtypeStruct((N, D), out_dtype),
        grid_spec=pltpu.PrefetchScalarGridSpec(
            num_scalar_prefetch=0,
            grid=grid,
            in_specs=[
                pl.BlockSpec((tm, tk), lambda i, k: (i, k),
                             pipeline_mode=adj_pipeline),
                xt_spec,
            ],
            out_specs=pl.BlockSpec((tm, D), lambda i, k: (i, 0)),
            scratch_shapes=[pltpu.VMEM((tm, D), jnp.float32)],
        ),
        compiler_params=pltpu.CompilerParams(
            dimension_semantics=("parallel", "arbitrary"),
            vmem_limit_bytes=vmem_limit),
        cost_estimate=pl.CostEstimate(
            flops=2 * N * N * D,
            transcendentals=4 * N,
            bytes_accessed=N * N * adj_bytes + N * D * xt_bytes + N * D * out_bytes),
    )(adj, xt)


def hyp_agg_ref(x, adj, c=1.0):
    """Pure-JAX reference mirroring the PyTorch forward (f32 throughout)."""
    sqrt_c = jnp.float32(math.sqrt(c))
    x_norm = jnp.maximum(jnp.linalg.norm(x, axis=-1, keepdims=True), MIN_NORM)
    x_t = _artanh(sqrt_c * x_norm) / (sqrt_c * x_norm) * x
    support_t = adj @ x_t
    u_norm = jnp.maximum(jnp.linalg.norm(support_t, axis=-1, keepdims=True), MIN_NORM)
    gamma = jnp.tanh(sqrt_c * u_norm) * support_t / (sqrt_c * u_norm)
    g_norm = jnp.maximum(jnp.linalg.norm(gamma, axis=-1, keepdims=True), MIN_NORM)
    maxnorm = (1.0 - EPS_F32) / sqrt_c
    return jnp.where(g_norm > maxnorm, gamma / g_norm * maxnorm, gamma)


# TODO(synk): use_att=True / local_agg branches need DenseAtt (not defined in the
# given module); only the use_att=False (spmm aggregation) path is implemented.
# TODO(synk): per-generation narrow-adjacency paths (fp8 on v7x, int8+per-row-scale
# on v5e/v6e) would further halve the HBM stream vs bf16; not implemented here.

if __name__ == "__main__":
    key = jax.random.PRNGKey(0)
    kx, ka = jax.random.split(key)

    N, D = 256, 32   # in_features = 32, small node count
    # Points on the Poincare ball: small-norm features so they lie inside the ball.
    x = 0.05 * jax.random.normal(kx, (N, D), dtype=jnp.float32)
    # Dense symmetric, row-normalized adjacency (stand-in for spmm's sparse adj).
    a = (jax.random.uniform(ka, (N, N)) > 0.9).astype(jnp.float32)
    a = jnp.minimum(a + a.T + jnp.eye(N, dtype=jnp.float32), 1.0)
    adj = a / jnp.sum(a, axis=-1, keepdims=True)

    ref = hyp_agg_ref(x, adj)

    # 1) Exact f32 matmul path, forced multi-tile grid to exercise the K-reduction
    #    accumulator (k==0 / k!=0 / finalize pl.when branches).
    out_f32 = jax.block_until_ready(
        hyp_agg(x, adj, matmul_dtype=jnp.float32, tm=128, tk=128))
    assert out_f32.shape == (N, D)
    assert jnp.allclose(out_f32, ref, atol=1e-5, rtol=1e-5), \
        float(jnp.max(jnp.abs(out_f32 - ref)))

    # 2) Default path: f32 adjacency streamed once and cast to bf16 per tile
    #    inside the kernel (no out-of-kernel N^2 cast pass).
    out_def = jax.block_until_ready(hyp_agg(x, adj))
    assert out_def.shape == (N, D)
    assert jnp.allclose(out_def, ref, atol=2e-3, rtol=2e-2), \
        float(jnp.max(jnp.abs(out_def - ref)))

    # 3) Caller-cached bf16 adjacency (cast once, reuse across layers/steps):
    #    halves the dominant HBM stream; kernel does no per-tile cast.
    adj_bf16 = adj.astype(jnp.bfloat16)
    out_bf16 = jax.block_until_ready(hyp_agg(x, adj_bf16))
    assert out_bf16.shape == (N, D)
    assert jnp.allclose(out_bf16, ref, atol=2e-3, rtol=2e-2), \
        float(jnp.max(jnp.abs(out_bf16 - ref)))

    print("KERNEL_OK")
</pallas_src>

<mosaic_0001>
module attributes {stable_mosaic.version = 11 : i64} {
  func.func @_logmap0_kernel(%arg0: i32, %arg1: memref<256x32xf32, #tpu.memory_space<vmem>>, %arg2: memref<256x32xf32, #tpu.memory_space<vmem>>) attributes {dimension_semantics = [#tpu.dimension_semantics<parallel>], iteration_bounds = array<i64: 1>, scalar_prefetch = 0 : i64, scratch_operands = 0 : i64, tpu.core_type = #tpu.core_type<tc>, window_params = [{transform_indices = @transform_0, window_bounds = array<i64: 256, 32>}, {transform_indices = @transform_1, window_bounds = array<i64: 256, 32>}]} {
    %c0 = arith.constant 0 : index
    %c0_0 = arith.constant 0 : index
    %0 = vector.load %arg1[%c0, %c0_0] : memref<256x32xf32, #tpu.memory_space<vmem>>, vector<256x32xf32>
    %1 = arith.mulf %0, %0 : vector<256x32xf32>
    %cst = arith.constant dense<0.000000e+00> : vector<256xf32>
    %2 = vector.multi_reduction <add>, %1, %cst [1] : vector<256x32xf32> to vector<256xf32>
    %3 = vector.shape_cast %2 : vector<256xf32> to vector<256x1xf32>
    %cst_1 = arith.constant 1.000000e-30 : f32
    %4 = vector.broadcast %cst_1 : f32 to vector<256x1xf32>
    %5 = arith.maximumf %3, %4 : vector<256x1xf32>
    %6 = math.rsqrt %5 : vector<256x1xf32>
    %7 = arith.mulf %3, %6 : vector<256x1xf32>
    %cst_2 = arith.constant 1.000000e+00 : f32
    %8 = vector.broadcast %cst_2 : f32 to vector<256x1xf32>
    %9 = arith.mulf %8, %7 : vector<256x1xf32>
    %cst_3 = arith.constant -1.000000e+00 : f32
    %cst_4 = arith.constant 1.000000e+00 : f32
    %10 = vector.broadcast %cst_3 : f32 to vector<256x1xf32>
    %11 = arith.maximumf %10, %9 : vector<256x1xf32>
    %12 = vector.broadcast %cst_4 : f32 to vector<256x1xf32>
    %13 = arith.minimumf %12, %11 : vector<256x1xf32>
    %14 = math.log1p %13 : vector<256x1xf32>
    %cst_5 = arith.constant 0.000000e+00 : f32
    %15 = vector.broadcast %cst_5 : f32 to vector<256x1xf32>
    %16 = arith.subf %15, %13 : vector<256x1xf32>
    %17 = math.log1p %16 : vector<256x1xf32>
    %18 = arith.subf %14, %17 : vector<256x1xf32>
    %cst_6 = arith.constant 5.000000e-01 : f32
    %19 = vector.broadcast %cst_6 : f32 to vector<256x1xf32>
    %20 = arith.mulf %19, %18 : vector<256x1xf32>
    %cst_7 = arith.constant 1.000000e+00 : f32
    %21 = vector.broadcast %cst_7 : f32 to vector<256x1xf32>
    %22 = arith.divf %6, %21 : vector<256x1xf32>
    %23 = arith.mulf %20, %22 : vector<256x1xf32>
    %24 = vector.broadcast %23 : vector<256x1xf32> to vector<256x32xf32>
    %25 = arith.mulf %24, %0 : vector<256x32xf32>
    %c0_8 = arith.constant 0 : index
    %c0_9 = arith.constant 0 : index
    %26 = vector.load %arg2[%c0_8, %c0_9] : memref<256x32xf32, #tpu.memory_space<vmem>>, vector<256x32xf32>
    tpu.vector_store %arg2[%c0_8, %c0_9], %25 {strides = array<i32>} : memref<256x32xf32, #tpu.memory_space<vmem>>, vector<256x32xf32>,
    return
  }
  func.func @transform_0(%arg0: i32) -> (i32, i32) {
    %c0_i32 = arith.constant 0 : i32
    %c0_i32_0 = arith.constant 0 : i32
    return %arg0, %c0_i32 : i32, i32
  }
  func.func @transform_1(%arg0: i32) -> (i32, i32) {
    %c0_i32 = arith.constant 0 : i32
    %c0_i32_0 = arith.constant 0 : i32
    return %arg0, %c0_i32 : i32, i32
  }
}

</mosaic_0001>

<llo_original>
// kernel: tpu_custom_call.1
$region0: #{tpu_custom_call.1}
  #allocation0 [shape = 'u32[]', space=smem, size = 0x4, offset = 0x4, fixed_abs, tag = 'smem constant byte address 0x4 - core index']
  #allocation1 [shape = 'u32[72,128]{1,0:T(1,128)}', space=vmem, size = 0x9000, scoped, tag = 'internal scratch']
  %s0 = inlined_call_operand.vmem [shape: f32[256,32], index: 0, kind: input, shape index: {}]
  %s1 = inlined_call_operand.vmem [shape: f32[256,32], index: 1, kind: output, shape index: {}]
  %s2 = sld [smem:[#allocation0]]
  $region14: #{tpu_custom_call.1} parent=0
    _
  %s4 = ssub.s32 1, %s2
  %s5 = scalar_select 0, %s4, %s2
  // Predicated region
  $region2: #{tpu_custom_call.1} parent=0 // pred_check
    _
  $region3: #{tpu_custom_call.1} parent=0 // pred_check_branch
    %7 = sbr.rel (0) target = $region5
  $region4: #{tpu_custom_call.1} parent=0 // pred_region
    _
  $region5: #{tpu_custom_call.1} parent=0 // pred_fallthru
    _
  %v8 = vld [vmem:[%s0] sm:$0xff]
  %v9 = vld [vmem:[%s0 + $0x8] sm:$0xff]
  %v10 = vld [vmem:[%s0 + $0x10] sm:$0xff]
  %v11 = vld [vmem:[%s0 + $0x18] sm:$0xff]
  %v12 = vld [vmem:[%s0 + $0x20] sm:$0xff]
  %v13 = vld [vmem:[%s0 + $0x28] sm:$0xff]
  %v14 = vld [vmem:[%s0 + $0x30] sm:$0xff]
  %v15 = vld [vmem:[%s0 + $0x38] sm:$0xff]
  %v16 = vld [vmem:[%s0 + $0x40] sm:$0xff]
  %v17 = vld [vmem:[%s0 + $0x48] sm:$0xff]
  %v18 = vld [vmem:[%s0 + $0x50] sm:$0xff]
  %v19 = vld [vmem:[%s0 + $0x58] sm:$0xff]
  %v20 = vld [vmem:[%s0 + $0x60] sm:$0xff]
  %v21 = vld [vmem:[%s0 + $0x68] sm:$0xff]
  %v22 = vld [vmem:[%s0 + $0x70] sm:$0xff]
  %v23 = vld [vmem:[%s0 + $0x78] sm:$0xff]
  %v24 = vld [vmem:[%s0 + $0x80] sm:$0xff]
  %v25 = vld [vmem:[%s0 + $0x88] sm:$0xff]
  %v26 = vld [vmem:[%s0 + $0x90] sm:$0xff]
  %v27 = vld [vmem:[%s0 + $0x98] sm:$0xff]
  %v28 = vld [vmem:[%s0 + $0xa0] sm:$0xff]
  %v29 = vld [vmem:[%s0 + $0xa8] sm:$0xff]
  %v30 = vld [vmem:[%s0 + $0xb0] sm:$0xff]
  %v31 = vld [vmem:[%s0 + $0xb8] sm:$0xff]
  %v32 = vld [vmem:[%s0 + $0xc0] sm:$0xff]
  %v33 = vld [vmem:[%s0 + $0xc8] sm:$0xff]
  %v34 = vld [vmem:[%s0 + $0xd0] sm:$0xff]
  %v35 = vld [vmem:[%s0 + $0xd8] sm:$0xff]
  %v36 = vld [vmem:[%s0 + $0xe0] sm:$0xff]
  %v37 = vld [vmem:[%s0 + $0xe8] sm:$0xff]
  %v38 = vld [vmem:[%s0 + $0xf0] sm:$0xff]
  %v39 = vld [vmem:[%s0 + $0xf8] sm:$0xff]
  %v40 = vmul.f32 %v8, %v8
  %v41 = vmul.f32 %v9, %v9
  %v42 = vmul.f32 %v10, %v10
  %v43 = vmul.f32 %v11, %v11
  %v44 = vmul.f32 %v12, %v12
  %v45 = vmul.f32 %v13, %v13
  %v46 = vmul.f32 %v14, %v14
  %v47 = vmul.f32 %v15, %v15
  %v48 = vmul.f32 %v16, %v16
  %v49 = vmul.f32 %v17, %v17
  %v50 = vmul.f32 %v18, %v18
  %v51 = vmul.f32 %v19, %v19
  %v52 = vmul.f32 %v20, %v20
  %v53 = vmul.f32 %v21, %v21
  %v54 = vmul.f32 %v22, %v22
  %v55 = vmul.f32 %v23, %v23
  %v56 = vmul.f32 %v24, %v24
  %v57 = vmul.f32 %v25, %v25
  %v58 = vmul.f32 %v26, %v26
  %v59 = vmul.f32 %v27, %v27
  %v60 = vmul.f32 %v28, %v28
  %v61 = vmul.f32 %v29, %v29
  %v62 = vmul.f32 %v30, %v30
  %v63 = vmul.f32 %v31, %v31
  %v64 = vmul.f32 %v32, %v32
  %v65 = vmul.f32 %v33, %v33
  %v66 = vmul.f32 %v34, %v34
  %v67 = vmul.f32 %v35, %v35
  %v68 = vmul.f32 %v36, %v36
  %v69 = vmul.f32 %v37, %v37
  %v70 = vmul.f32 %v38, %v38
  %v71 = vmul.f32 %v39, %v39
  %vm72 = vcmask 261120
  %v73 = vsel %vm72, %v40, 0.0
  %74 = vadd.xlane.f32.xlu0 %v73
  %v75 = vpop.xlane.xlu0 %74
  %v76 = vsel %vm72, %v41, 0.0
  %77 = vadd.xlane.f32.xlu0 %v76
  %v78 = vpop.xlane.xlu0 %77
  %v79 = vsel %vm72, %v42, 0.0
  %80 = vadd.xlane.f32.xlu0 %v79
  %v81 = vpop.xlane.xlu0 %80
  %v82 = vsel %vm72, %v43, 0.0
  %83 = vadd.xlane.f32.xlu0 %v82
  %v84 = vpop.xlane.xlu0 %83
  %v85 = vsel %vm72, %v44, 0.0
  %86 = vadd.xlane.f32.xlu0 %v85
  %v87 = vpop.xlane.xlu0 %86
  %v88 = vsel %vm72, %v45, 0.0
  %89 = vadd.xlane.f32.xlu0 %v88
  %v90 = vpop.xlane.xlu0 %89
  %v91 = vsel %vm72, %v46, 0.0
  %92 = vadd.xlane.f32.xlu0 %v91
  %v93 = vpop.xlane.xlu0 %92
  %v94 = vsel %vm72, %v47, 0.0
  %95 = vadd.xlane.f32.xlu0 %v94
  %v96 = vpop.xlane.xlu0 %95
  %v97 = vsel %vm72, %v48, 0.0
  %98 = vadd.xlane.f32.xlu0 %v97
  %v99 = vpop.xlane.xlu0 %98
  %v100 = vsel %vm72, %v49, 0.0
  %101 = vadd.xlane.f32.xlu0 %v100
  %v102 = vpop.xlane.xlu0 %101
  %v103 = vsel %vm72, %v50, 0.0
  %104 = vadd.xlane.f32.xlu0 %v103
  %v105 = vpop.xlane.xlu0 %104
  %v106 = vsel %vm72, %v51, 0.0
  %107 = vadd.xlane.f32.xlu0 %v106
  %v108 = vpop.xlane.xlu0 %107
  %v109 = vsel %vm72, %v52, 0.0
  %110 = vadd.xlane.f32.xlu0 %v109
  %v111 = vpop.xlane.xlu0 %110
  %v112 = vsel %vm72, %v53, 0.0
  %113 = vadd.xlane.f32.xlu0 %v112
  %v114 = vpop.xlane.xlu0 %113
  %v115 = vsel %vm72, %v54, 0.0
  %116 = vadd.xlane.f32.xlu0 %v115
  %v117 = vpop.xlane.xlu0 %116
  %v118 = vsel %vm72, %v55, 0.0
  %119 = vadd.xlane.f32.xlu0 %v118
  %v120 = vpop.xlane.xlu0 %119
  %v121 = vsel %vm72, %v56, 0.0
  %122 = vadd.xlane.f32.xlu0 %v121
  %v123 = vpop.xlane.xlu0 %122
  %v124 = vsel %vm72, %v57, 0.0
  %125 = vadd.xlane.f32.xlu0 %v124
  %v126 = vpop.xlane.xlu0 %125
  %v127 = vsel %vm72, %v58, 0.0
  %128 = vadd.xlane.f32.xlu0 %v127
  %v129 = vpop.xlane.xlu0 %128
  %v130 = vsel %vm72, %v59, 0.0
  %131 = vadd.xlane.f32.xlu0 %v130
  %v132 = vpop.xlane.xlu0 %131
  %v133 = vsel %vm72, %v60, 0.0
  %134 = vadd.xlane.f32.xlu0 %v133
  %v135 = vpop.xlane.xlu0 %134
  %v136 = vsel %vm72, %v61, 0.0
  %137 = vadd.xlane.f32.xlu0 %v136
  %v138 = vpop.xlane.xlu0 %137
  %v139 = vsel %vm72, %v62, 0.0
  %140 = vadd.xlane.f32.xlu0 %v139
  %v141 = vpop.xlane.xlu0 %140
  %v142 = vsel %vm72, %v63, 0.0
  %143 = vadd.xlane.f32.xlu0 %v142
  %v144 = vpop.xlane.xlu0 %143
  %v145 = vsel %vm72, %v64, 0.0
  %146 = vadd.xlane.f32.xlu0 %v145
  %v147 = vpop.xlane.xlu0 %146
  %v148 = vsel %vm72, %v65, 0.0
  %149 = vadd.xlane.f32.xlu0 %v148
  %v150 = vpop.xlane.xlu0 %149
  %v151 = vsel %vm72, %v66, 0.0
  %152 = vadd.xlane.f32.xlu0 %v151
  %v153 = vpop.xlane.xlu0 %152
  %v154 = vsel %vm72, %v67, 0.0
  %155 = vadd.xlane.f32.xlu0 %v154
  %v156 = vpop.xlane.xlu0 %155
  %v157 = vsel %vm72, %v68, 0.0
  %158 = vadd.xlane.f32.xlu0 %v157
  %v159 = vpop.xlane.xlu0 %158
  %v160 = vsel %vm72, %v69, 0.0
  %161 = vadd.xlane.f32.xlu0 %v160
  %v162 = vpop.xlane.xlu0 %161
  %v163 = vsel %vm72, %v70, 0.0
  %164 = vadd.xlane.f32.xlu0 %v163
  %v165 = vpop.xlane.xlu0 %164
  %v166 = vsel %vm72, %v71, 0.0
  %167 = vadd.xlane.f32.xlu0 %v166
  %v168 = vpop.xlane.xlu0 %167
  %v169 = vmax.f32 %v75, 1e-30
  %v170 = vmax.f32 %v78, 1e-30
  %v171 = vmax.f32 %v81, 1e-30
  %v172 = vmax.f32 %v84, 1e-30
  %v173 = vmax.f32 %v87, 1e-30
  %v174 = vmax.f32 %v90, 1e-30
  %v175 = vmax.f32 %v93, 1e-30
  %v176 = vmax.f32 %v96, 1e-30
  %v177 = vmax.f32 %v99, 1e-30
  %v178 = vmax.f32 %v102, 1e-30
  %v179 = vmax.f32 %v105, 1e-30
  %v180 = vmax.f32 %v108, 1e-30
  %v181 = vmax.f32 %v111, 1e-30
  %v182 = vmax.f32 %v114, 1e-30
  %v183 = vmax.f32 %v117, 1e-30
  %v184 = vmax.f32 %v120, 1e-30
  %v185 = vmax.f32 %v123, 1e-30
  %v186 = vmax.f32 %v126, 1e-30
  %v187 = vmax.f32 %v129, 1e-30
  %v188 = vmax.f32 %v132, 1e-30
  %v189 = vmax.f32 %v135, 1e-30
  %v190 = vmax.f32 %v138, 1e-30
  %v191 = vmax.f32 %v141, 1e-30
  %v192 = vmax.f32 %v144, 1e-30
  %v193 = vmax.f32 %v147, 1e-30
  %v194 = vmax.f32 %v150, 1e-30
  %v195 = vmax.f32 %v153, 1e-30
  %v196 = vmax.f32 %v156, 1e-30
  %v197 = vmax.f32 %v159, 1e-30
  %v198 = vmax.f32 %v162, 1e-30
  %v199 = vmax.f32 %v165, 1e-30
  %v200 = vmax.f32 %v168, 1e-30
  %v201 = vrsqrt.pop %v169
  %v202 = vmul.f32 %v201, %v169
  %v203 = vmul.f32 %v202, %v201
  %v204 = vmul.f32 0.5, %v203
  %v205 = vsub.f32 1.5, %v204
  %v206 = vmul.f32 %v201, %v205
  %vm207 = vweird.f32 %v169
  %vm208 = vweird.f32 %v201
  %vm209 = vmor %vm207, %vm208
  %v210 = vsel %vm209, %v201, %v206
  %v211 = vrsqrt.pop %v170
  %v212 = vmul.f32 %v211, %v170
  %v213 = vmul.f32 %v212, %v211
  %v214 = vmul.f32 0.5, %v213
  %v215 = vsub.f32 1.5, %v214
  %v216 = vmul.f32 %v211, %v215
  %vm217 = vweird.f32 %v170
  %vm218 = vweird.f32 %v211
  %vm219 = vmor %vm217, %vm218
  %v220 = vsel %vm219, %v211, %v216
  %v221 = vrsqrt.pop %v171
  %v222 = vmul.f32 %v221, %v171
  %v223 = vmul.f32 %v222, %v221
  %v224 = vmul.f32 0.5, %v223
  %v225 = vsub.f32 1.5, %v224
  %v226 = vmul.f32 %v221, %v225
  %vm227 = vweird.f32 %v171
  %vm228 = vweird.f32 %v221
  %vm229 = vmor %vm227, %vm228
  %v230 = vsel %vm229, %v221, %v226
  %v231 = vrsqrt.pop %v172
  %v232 = vmul.f32 %v231, %v172
  %v233 = vmul.f32 %v232, %v231
  %v234 = vmul.f32 0.5, %v233
  %v235 = vsub.f32 1.5, %v234
  %v236 = vmul.f32 %v231, %v235
  %vm237 = vweird.f32 %v172
  %vm238 = vweird.f32 %v231
  %vm239 = vmor %vm237, %vm238
  %v240 = vsel %vm239, %v231, %v236
  %v241 = vrsqrt.pop %v173
  %v242 = vmul.f32 %v241, %v173
  %v243 = vmul.f32 %v242, %v241
  %v244 = vmul.f32 0.5, %v243
  %v245 = vsub.f32 1.5, %v244
  %v246 = vmul.f32 %v241, %v245
  %vm247 = vweird.f32 %v173
  %vm248 = vweird.f32 %v241
  %vm249 = vmor %vm247, %vm248
  %v250 = vsel %vm249, %v241, %v246
  %v251 = vrsqrt.pop %v174
  %v252 = vmul.f32 %v251, %v174
  %v253 = vmul.f32 %v252, %v251
  %v254 = vmul.f32 0.5, %v253
  %v255 = vsub.f32 1.5, %v254
  %v256 = vmul.f32 %v251, %v255
  %vm257 = vweird.f32 %v174
  %vm258 = vweird.f32 %v251
  %vm259 = vmor %vm257, %vm258
  %v260 = vsel %vm259, %v251, %v256
  %v261 = vrsqrt.pop %v175
  %v262 = vmul.f32 %v261, %v175
  %v263 = vmul.f32 %v262, %v261
  %v264 = vmul.f32 0.5, %v263
  %v265 = vsub.f32 1.5, %v264
  %v266 = vmul.f32 %v261, %v265
  %vm267 = vweird.f32 %v175
  %vm268 = vweird.f32 %v261
  %vm269 = vmor %vm267, %vm268
  %v270 = vsel %vm269, %v261, %v266
  %v271 = vrsqrt.pop %v176
  %v272 = vmul.f32 %v271, %v176
  %v273 = vmul.f32 %v272, %v271
  %v274 = vmul.f32 0.5, %v273
  %v275 = vsub.f32 1.5, %v274
  %v276 = vmul.f32 %v271, %v275
  %vm277 = vweird.f32 %v176
  %vm278 = vweird.f32 %v271
  %vm279 = vmor %vm277, %vm278
  %v280 = vsel %vm279, %v271, %v276
  %v281 = vrsqrt.pop %v177
  %v282 = vmul.f32 %v281, %v177
  %v283 = vmul.f32 %v282, %v281
  %v284 = vmul.f32 0.5, %v283
  %v285 = vsub.f32 1.5, %v284
  %v286 = vmul.f32 %v281, %v285
  %vm287 = vweird.f32 %v177
  %vm288 = vweird.f32 %v281
  %vm289 = vmor %vm287, %vm288
  %v290 = vsel %vm289, %v281, %v286
  %v291 = vrsqrt.pop %v178
  %v292 = vmul.f32 %v291, %v178
  %v293 = vmul.f32 %v292, %v291
  %v294 = vmul.f32 0.5, %v293
  %v295 = vsub.f32 1.5, %v294
  %v296 = vmul.f32 %v291, %v295
  %vm297 = vweird.f32 %v178
  %vm298 = vweird.f32 %v291
  %vm299 = vmor %vm297, %vm298
  %v300 = vsel %vm299, %v291, %v296
  %v301 = vrsqrt.pop %v179
  %v302 = vmul.f32 %v301, %v179
  %v303 = vmul.f32 %v302, %v301
  %v304 = vmul.f32 0.5, %v303
  %v305 = vsub.f32 1.5, %v304
  %v306 = vmul.f32 %v301, %v305
  %vm307 = vweird.f32 %v179
  %vm308 = vweird.f32 %v301
  %vm309 = vmor %vm307, %vm308
  %v310 = vsel %vm309, %v301, %v306
  %v311 = vrsqrt.pop %v180
  %v312 = vmul.f32 %v311, %v180
  %v313 = vmul.f32 %v312, %v311
  %v314 = vmul.f32 0.5, %v313
  %v315 = vsub.f32 1.5, %v314
  %v316 = vmul.f32 %v311, %v315
  %vm317 = vweird.f32 %v180
  %vm318 = vweird.f32 %v311
  %vm319 = vmor %vm317, %vm318
  %v320 = vsel %vm319, %v311, %v316
  %v321 = vrsqrt.pop %v181
  %v322 = vmul.f32 %v321, %v181
  %v323 = vmul.f32 %v322, %v321
  %v324 = vmul.f32 0.5, %v323
  %v325 = vsub.f32 1.5, %v324
  %v326 = vmul.f32 %v321, %v325
  %vm327 = vweird.f32 %v181
  %vm328 = vweird.f32 %v321
  %vm329 = vmor %vm327, %vm328
  %v330 = vsel %vm329, %v321, %v326
  %v331 = vrsqrt.pop %v182
  %v332 = vmul.f32 %v331, %v182
  %v333 = vmul.f32 %v332, %v331
  %v334 = vmul.f32 0.5, %v333
  %v335 = vsub.f32 1.5, %v334
  %v336 = vmul.f32 %v331, %v335
  %vm337 = vweird.f32 %v182
  %vm338 = vweird.f32 %v331
  %vm339 = vmor %vm337, %vm338
  %v340 = vsel %vm339, %v331, %v336
  %v341 = vrsqrt.pop %v183
  %v342 = vmul.f32 %v341, %v183
  %v343 = vmul.f32 %v342, %v341
  %v344 = vmul.f32 0.5, %v343
  %v345 = vsub.f32 1.5, %v344
  %v346 = vmul.f32 %v341, %v345
  %vm347 = vweird.f32 %v183
  %vm348 = vweird.f32 %v341
  %vm349 = vmor %vm347, %vm348
  %v350 = vsel %vm349, %v341, %v346
  %v351 = vrsqrt.pop %v184
  %v352 = vmul.f32 %v351, %v184
  %v353 = vmul.f32 %v352, %v351
  %v354 = vmul.f32 0.5, %v353
  %v355 = vsub.f32 1.5, %v354
  %v356 = vmul.f32 %v351, %v355
  %vm357 = vweird.f32 %v184
  %vm358 = vweird.f32 %v351
  %vm359 = vmor %vm357, %vm358
  %v360 = vsel %vm359, %v351, %v356
  %v361 = vrsqrt.pop %v185
  %v362 = vmul.f32 %v361, %v185
  %v363 = vmul.f32 %v362, %v361
  %v364 = vmul.f32 0.5, %v363
  %v365 = vsub.f32 1.5, %v364
  %v366 = vmul.f32 %v361, %v365
  %vm367 = vweird.f32 %v185
  %vm368 = vweird.f32 %v361
  %vm369 = vmor %vm367, %vm368
  %v370 = vsel %vm369, %v361, %v366
  %v371 = vrsqrt.pop %v186
  %v372 = vmul.f32 %v371, %v186
  %v373 = vmul.f32 %v372, %v371
  %v374 = vmul.f32 0.5, %v373
  %v375 = vsub.f32 1.5, %v374
  %v376 = vmul.f32 %v371, %v375
  %vm377 = vweird.f32 %v186
  %vm378 = vweird.f32 %v371
  %vm379 = vmor %vm377, %vm378
  %v380 = vsel %vm379, %v371, %v376
  %v381 = vrsqrt.pop %v187
  %v382 = vmul.f32 %v381, %v187
  %v383 = vmul.f32 %v382, %v381
  %v384 = vmul.f32 0.5, %v383
  %v385 = vsub.f32 1.5, %v384
  %v386 = vmul.f32 %v381, %v385
  %vm387 = vweird.f32 %v187
  %vm388 = vweird.f32 %v381
  %vm389 = vmor %vm387, %vm388
  %v390 = vsel %vm389, %v381, %v386
  %v391 = vrsqrt.pop %v188
  %v392 = vmul.f32 %v391, %v188
  %v393 = vmul.f32 %v392, %v391
  %v394 = vmul.f32 0.5, %v393
  %v395 = vsub.f32 1.5, %v394
  %v396 = vmul.f32 %v391, %v395
  %vm397 = vweird.f32 %v188
  %vm398 = vweird.f32 %v391
  %vm399 = vmor %vm397, %vm398
  %v400 = vsel %vm399, %v391, %v396
  %v401 = vrsqrt.pop %v189
  %v402 = vmul.f32 %v401, %v189
  %v403 = vmul.f32 %v402, %v401
  %v404 = vmul.f32 0.5, %v403
  %v405 = vsub.f32 1.5, %v404
  %v406 = vmul.f32 %v401, %v405
  %vm407 = vweird.f32 %v189
  %vm408 = vweird.f32 %v401
  %vm409 = vmor %vm407, %vm408
  %v410 = vsel %vm409, %v401, %v406
  %v411 = vrsqrt.pop %v190
  %v412 = vmul.f32 %v411, %v190
  %v413 = vmul.f32 %v412, %v411
  %v414 = vmul.f32 0.5, %v413
  %v415 = vsub.f32 1.5, %v414
  %v416 = vmul.f32 %v411, %v415
  %vm417 = vweird.f32 %v190
  %vm418 = vweird.f32 %v411
  %vm419 = vmor %vm417, %vm418
  %v420 = vsel %vm419, %v411, %v416
  %v421 = vrsqrt.pop %v191
  %v422 = vmul.f32 %v421, %v191
  %v423 = vmul.f32 %v422, %v421
  %v424 = vmul.f32 0.5, %v423
  %v425 = vsub.f32 1.5, %v424
  %v426 = vmul.f32 %v421, %v425
  %vm427 = vweird.f32 %v191
  %vm428 = vweird.f32 %v421
  %vm429 = vmor %vm427, %vm428
  %v430 = vsel %vm429, %v421, %v426
  %v431 = vrsqrt.pop %v192
  %v432 = vmul.f32 %v431, %v192
  %v433 = vmul.f32 %v432, %v431
  %v434 = vmul.f32 0.5, %v433
  %v435 = vsub.f32 1.5, %v434
  %v436 = vmul.f32 %v431, %v435
  %vm437 = vweird.f32 %v192
  %vm438 = vweird.f32 %v431
  %vm439 = vmor %vm437, %vm438
  %v440 = vsel %vm439, %v431, %v436
  %v441 = vrsqrt.pop %v193
  %v442 = vmul.f32 %v441, %v193
  %v443 = vmul.f32 %v442, %v441
  %v444 = vmul.f32 0.5, %v443
  %v445 = vsub.f32 1.5, %v444
  %v446 = vmul.f32 %v441, %v445
  %vm447 = vweird.f32 %v193
  %vm448 = vweird.f32 %v441
  %vm449 = vmor %vm447, %vm448
  %v450 = vsel %vm449, %v441, %v446
  %v451 = vrsqrt.pop %v194
  %v452 = vmul.f32 %v451, %v194
  %v453 = vmul.f32 %v452, %v451
  %v454 = vmul.f32 0.5, %v453
  %v455 = vsub.f32 1.5, %v454
  %v456 = vmul.f32 %v451, %v455
  %vm457 = vweird.f32 %v194
  %vm458 = vweird.f32 %v451
  %vm459 = vmor %vm457, %vm458
  %v460 = vsel %vm459, %v451, %v456
  %v461 = vrsqrt.pop %v195
  %v462 = vmul.f32 %v461, %v195
  %v463 = vmul.f32 %v462, %v461
  %v464 = vmul.f32 0.5, %v463
  %v465 = vsub.f32 1.5, %v464
  %v466 = vmul.f32 %v461, %v465
  %vm467 = vweird.f32 %v195
  %vm468 = vweird.f32 %v461
  %vm469 = vmor %vm467, %vm468
  %v470 = vsel %vm469, %v461, %v466
  %v471 = vrsqrt.pop %v196
  %v472 = vmul.f32 %v471, %v196
  %v473 = vmul.f32 %v472, %v471
  %v474 = vmul.f32 0.5, %v473
  %v475 = vsub.f32 1.5, %v474
  %v476 = vmul.f32 %v471, %v475
  %vm477 = vweird.f32 %v196
  %vm478 = vweird.f32 %v471
  %vm479 = vmor %vm477, %vm478
  %v480 = vsel %vm479, %v471, %v476
  %v481 = vrsqrt.pop %v197
  %v482 = vmul.f32 %v481, %v197
  %v483 = vmul.f32 %v482, %v481
  %v484 = vmul.f32 0.5, %v483
  %v485 = vsub.f32 1.5, %v484
  %v486 = vmul.f32 %v481, %v485
  %vm487 = vweird.f32 %v197
  %vm488 = vweird.f32 %v481
  %vm489 = vmor %vm487, %vm488
  %v490 = vsel %vm489, %v481, %v486
  %v491 = vrsqrt.pop %v198
  %v492 = vmul.f32 %v491, %v198
  %v493 = vmul.f32 %v492, %v491
  %v494 = vmul.f32 0.5, %v493
  %v495 = vsub.f32 1.5, %v494
  %v496 = vmul.f32 %v491, %v495
  %vm497 = vweird.f32 %v198
  %vm498 = vweird.f32 %v491
  %vm499 = vmor %vm497, %vm498
  %v500 = vsel %vm499, %v491, %v496
  %v501 = vrsqrt.pop %v199
  %v502 = vmul.f32 %v501, %v199
  %v503 = vmul.f32 %v502, %v501
  %v504 = vmul.f32 0.5, %v503
  %v505 = vsub.f32 1.5, %v504
  %v506 = vmul.f32 %v501, %v505
  %vm507 = vweird.f32 %v199
  %vm508 = vweird.f32 %v501
  %vm509 = vmor %vm507, %vm508
  %v510 = vsel %vm509, %v501, %v506
  %v511 = vrsqrt.pop %v200
  %v512 = vmul.f32 %v511, %v200
  %v513 = vmul.f32 %v512, %v511
  %v514 = vmul.f32 0.5, %v513
  %v515 = vsub.f32 1.5, %v514
  %v516 = vmul.f32 %v511, %v515
  %vm517 = vweird.f32 %v200
  %vm518 = vweird.f32 %v511
  %vm519 = vmor %vm517, %vm518
  %v520 = vsel %vm519, %v511, %v516
  %v521 = vmul.f32 %v75, %v210
  %v522 = vmul.f32 %v78, %v220
  %v523 = vmul.f32 %v81, %v230
  %v524 = vmul.f32 %v84, %v240
  %v525 = vmul.f32 %v87, %v250
  %v526 = vmul.f32 %v90, %v260
  %v527 = vmul.f32 %v93, %v270
  %v528 = vmul.f32 %v96, %v280
  %v529 = vmul.f32 %v99, %v290
  %v530 = vmul.f32 %v102, %v300
  %v531 = vmul.f32 %v105, %v310
  %v532 = vmul.f32 %v108, %v320
  %v533 = vmul.f32 %v111, %v330
  %v534 = vmul.f32 %v114, %v340
  %v535 = vmul.f32 %v117, %v350
  %v536 = vmul.f32 %v120, %v360
  %v537 = vmul.f32 %v123, %v370
  %v538 = vmul.f32 %v126, %v380
  %v539 = vmul.f32 %v129, %v390
  %v540 = vmul.f32 %v132, %v400
  %v541 = vmul.f32 %v135, %v410
  %v542 = vmul.f32 %v138, %v420
  %v543 = vmul.f32 %v141, %v430
  %v544 = vmul.f32 %v144, %v440
  %v545 = vmul.f32 %v147, %v450
  %v546 = vmul.f32 %v150, %v460
  %v547 = vmul.f32 %v153, %v470
  %v548 = vmul.f32 %v156, %v480
  %v549 = vmul.f32 %v159, %v490
  %v550 = vmul.f32 %v162, %v500
  %v551 = vmul.f32 %v165, %v510
  %v552 = vmul.f32 %v168, %v520
  %v553 = vmax.f32 %v521, -1.0
  %v554 = vmax.f32 %v522, -1.0
  %v555 = vmax.f32 %v523, -1.0
  %v556 = vmax.f32 %v524, -1.0
  %v557 = vmax.f32 %v525, -1.0
  %v558 = vmax.f32 %v526, -1.0
  %v559 = vmax.f32 %v527, -1.0
  %v560 = vmax.f32 %v528, -1.0
  %v561 = vmax.f32 %v529, -1.0
  %v562 = vmax.f32 %v530, -1.0
  %v563 = vmax.f32 %v531, -1.0
  %v564 = vmax.f32 %v532, -1.0
  %v565 = vmax.f32 %v533, -1.0
  %v566 = vmax.f32 %v534, -1.0
  %v567 = vmax.f32 %v535, -1.0
  %v568 = vmax.f32 %v536, -1.0
  %v569 = vmax.f32 %v537, -1.0
  %v570 = vmax.f32 %v538, -1.0
  %v571 = vmax.f32 %v539, -1.0
  %v572 = vmax.f32 %v540, -1.0
  %v573 = vmax.f32 %v541, -1.0
  %v574 = vmax.f32 %v542, -1.0
  %v575 = vmax.f32 %v543, -1.0
  %v576 = vmax.f32 %v544, -1.0
  %v577 = vmax.f32 %v545, -1.0
  %v578 = vmax.f32 %v546, -1.0
  %v579 = vmax.f32 %v547, -1.0
  %v580 = vmax.f32 %v548, -1.0
  %v581 = vmax.f32 %v549, -1.0
  %v582 = vmax.f32 %v550, -1.0
  %v583 = vmax.f32 %v551, -1.0
  %v584 = vmax.f32 %v552, -1.0
  %v585 = vmin.f32 %v553, 1.0
  %v586 = vmin.f32 %v554, 1.0
  %v587 = vmin.f32 %v555, 1.0
  %v588 = vmin.f32 %v556, 1.0
  %v589 = vmin.f32 %v557, 1.0
  %v590 = vmin.f32 %v558, 1.0
  %v591 = vmin.f32 %v559, 1.0
  %v592 = vmin.f32 %v560, 1.0
  %v593 = vmin.f32 %v561, 1.0
  %v594 = vmin.f32 %v562, 1.0
  %v595 = vmin.f32 %v563, 1.0
  %v596 = vmin.f32 %v564, 1.0
  %v597 = vmin.f32 %v565, 1.0
  %v598 = vmin.f32 %v566, 1.0
  %v599 = vmin.f32 %v567, 1.0
  %v600 = vmin.f32 %v568, 1.0
  %v601 = vmin.f32 %v569, 1.0
  %v602 = vmin.f32 %v570, 1.0
  %v603 = vmin.f32 %v571, 1.0
  %v604 = vmin.f32 %v572, 1.0
  %v605 = vmin.f32 %v573, 1.0
  %v606 = vmin.f32 %v574, 1.0
  %v607 = vmin.f32 %v575, 1.0
  %v608 = vmin.f32 %v576, 1.0
  %v609 = vmin.f32 %v577, 1.0
  %v610 = vmin.f32 %v578, 1.0
  %v611 = vmin.f32 %v579, 1.0
  %v612 = vmin.f32 %v580, 1.0
  %v613 = vmin.f32 %v581, 1.0
  %v614 = vmin.f32 %v582, 1.0
  %v615 = vmin.f32 %v583, 1.0
  %v616 = vmin.f32 %v584, 1.0
  %v617 = vadd.f32 %v585, 1.0
  %v618 = vlog2.pop %v617
  %v619 = vmul.f32 %v618, 0.6931472
  %v620 = vmul.f32 -0.5, %v585
  %v621 = vadd.f32 %v620, 1.0
  %v622 = vmul.f32 %v621, %v585
  %v623 = vand.u32 2147483647, %v585
  %vm624 = vcmp.lt.f32.partialorder %v623, 0.0004427343
  %v625 = vsel %vm624, %v622, %v619
  %v626 = vadd.f32 %v586, 1.0
  %v627 = vlog2.pop %v626
  %v628 = vmul.f32 %v627, 0.6931472
  %v629 = vmul.f32 -0.5, %v586
  %v630 = vadd.f32 %v629, 1.0
  %v631 = vmul.f32 %v630, %v586
  %v632 = vand.u32 2147483647, %v586
  %vm633 = vcmp.lt.f32.partialorder %v632, 0.0004427343
  %v634 = vsel %vm633, %v631, %v628
  %v635 = vadd.f32 %v587, 1.0
  %v636 = vlog2.pop %v635
  %v637 = vmul.f32 %v636, 0.6931472
  %v638 = vmul.f32 -0.5, %v587
  %v639 = vadd.f32 %v638, 1.0
  %v640 = vmul.f32 %v639, %v587
  %v641 = vand.u32 2147483647, %v587
  %vm642 = vcmp.lt.f32.partialorder %v641, 0.0004427343
  %v643 = vsel %vm642, %v640, %v637
  %v644 = vadd.f32 %v588, 1.0
  %v645 = vlog2.pop %v644
  %v646 = vmul.f32 %v645, 0.6931472
  %v647 = vmul.f32 -0.5, %v588
  %v648 = vadd.f32 %v647, 1.0
  %v649 = vmul.f32 %v648, %v588
  %v650 = vand.u32 2147483647, %v588
  %vm651 = vcmp.lt.f32.partialorder %v650, 0.0004427343
  %v652 = vsel %vm651, %v649, %v646
  %v653 = vadd.f32 %v589, 1.0
  %v654 = vlog2.pop %v653
  %v655 = vmul.f32 %v654, 0.6931472
  %v656 = vmul.f32 -0.5, %v589
  %v657 = vadd.f32 %v656, 1.0
  %v658 = vmul.f32 %v657, %v589
  %v659 = vand.u32 2147483647, %v589
  %vm660 = vcmp.lt.f32.partialorder %v659, 0.0004427343
  %v661 = vsel %vm660, %v658, %v655
  %v662 = vadd.f32 %v590, 1.0
  %v663 = vlog2.pop %v662
  %v664 = vmul.f32 %v663, 0.6931472
  %v665 = vmul.f32 -0.5, %v590
  %v666 = vadd.f32 %v665, 1.0
  %v667 = vmul.f32 %v666, %v590
  %v668 = vand.u32 2147483647, %v590
  %vm669 = vcmp.lt.f32.partialorder %v668, 0.0004427343
  %v670 = vsel %vm669, %v667, %v664
  %v671 = vadd.f32 %v591, 1.0
  %v672 = vlog2.pop %v671
  %v673 = vmul.f32 %v672, 0.6931472
  %v674 = vmul.f32 -0.5, %v591
  %v675 = vadd.f32 %v674, 1.0
  %v676 = vmul.f32 %v675, %v591
  %v677 = vand.u32 2147483647, %v591
  %vm678 = vcmp.lt.f32.partialorder %v677, 0.0004427343
  %v679 = vsel %vm678, %v676, %v673
  %v680 = vadd.f32 %v592, 1.0
  %v681 = vlog2.pop %v680
  %v682 = vmul.f32 %v681, 0.6931472
  %v683 = vmul.f32 -0.5, %v592
  %v684 = vadd.f32 %v683, 1.0
  %v685 = vmul.f32 %v684, %v592
  %v686 = vand.u32 2147483647, %v592
  %vm687 = vcmp.lt.f32.partialorder %v686, 0.0004427343
  %v688 = vsel %vm687, %v685, %v682
  %v689 = vadd.f32 %v593, 1.0
  %v690 = vlog2.pop %v689
  %v691 = vmul.f32 %v690, 0.6931472
  %v692 = vmul.f32 -0.5, %v593
  %v693 = vadd.f32 %v692, 1.0
  %v694 = vmul.f32 %v693, %v593
  %v695 = vand.u32 2147483647, %v593
  %vm696 = vcmp.lt.f32.partialorder %v695, 0.0004427343
  %v697 = vsel %vm696, %v694, %v691
  %v698 = vadd.f32 %v594, 1.0
  %v699 = vlog2.pop %v698
  %v700 = vmul.f32 %v699, 0.6931472
  %v701 = vmul.f32 -0.5, %v594
  %v702 = vadd.f32 %v701, 1.0
  %v703 = vmul.f32 %v702, %v594
  %v704 = vand.u32 2147483647, %v594
  %vm705 = vcmp.lt.f32.partialorder %v704, 0.0004427343
  %v706 = vsel %vm705, %v703, %v700
  %v707 = vadd.f32 %v595, 1.0
  %v708 = vlog2.pop %v707
  %v709 = vmul.f32 %v708, 0.6931472
  %v710 = vmul.f32 -0.5, %v595
  %v711 = vadd.f32 %v710, 1.0
  %v712 = vmul.f32 %v711, %v595
  %v713 = vand.u32 2147483647, %v595
  %vm714 = vcmp.lt.f32.partialorder %v713, 0.0004427343
  %v715 = vsel %vm714, %v712, %v709
  %v716 = vadd.f32 %v596, 1.0
  %v717 = vlog2.pop %v716
  %v718 = vmul.f32 %v717, 0.6931472
  %v719 = vmul.f32 -0.5, %v596
  %v720 = vadd.f32 %v719, 1.0
  %v721 = vmul.f32 %v720, %v596
  %v722 = vand.u32 2147483647, %v596
  %vm723 = vcmp.lt.f32.partialorder %v722, 0.0004427343
  %v724 = vsel %vm723, %v721, %v718
  %v725 = vadd.f32 %v597, 1.0
  %v726 = vlog2.pop %v725
  %v727 = vmul.f32 %v726, 0.6931472
  %v728 = vmul.f32 -0.5, %v597
  %v729 = vadd.f32 %v728, 1.0
  %v730 = vmul.f32 %v729, %v597
  %v731 = vand.u32 2147483647, %v597
  %vm732 = vcmp.lt.f32.partialorder %v731, 0.0004427343
  %v733 = vsel %vm732, %v730, %v727
  %v734 = vadd.f32 %v598, 1.0
  %v735 = vlog2.pop %v734
  %v736 = vmul.f32 %v735, 0.6931472
  %v737 = vmul.f32 -0.5, %v598
  %v738 = vadd.f32 %v737, 1.0
  %v739 = vmul.f32 %v738, %v598
  %v740 = vand.u32 2147483647, %v598
  %vm741 = vcmp.lt.f32.partialorder %v740, 0.0004427343
  %v742 = vsel %vm741, %v739, %v736
  %v743 = vadd.f32 %v599, 1.0
  %v744 = vlog2.pop %v743
  %v745 = vmul.f32 %v744, 0.6931472
  %v746 = vmul.f32 -0.5, %v599
  %v747 = vadd.f32 %v746, 1.0
  %v748 = vmul.f32 %v747, %v599
  %v749 = vand.u32 2147483647, %v599
  %vm750 = vcmp.lt.f32.partialorder %v749, 0.0004427343
  %v751 = vsel %vm750, %v748, %v745
  %v752 = vadd.f32 %v600, 1.0
  %v753 = vlog2.pop %v752
  %v754 = vmul.f32 %v753, 0.6931472
  %v755 = vmul.f32 -0.5, %v600
  %v756 = vadd.f32 %v755, 1.0
  %v757 = vmul.f32 %v756, %v600
  %v758 = vand.u32 2147483647, %v600
  %vm759 = vcmp.lt.f32.partialorder %v758, 0.0004427343
  %v760 = vsel %vm759, %v757, %v754
  %v761 = vadd.f32 %v601, 1.0
  %v762 = vlog2.pop %v761
  %v763 = vmul.f32 %v762, 0.6931472
  %v764 = vmul.f32 -0.5, %v601
  %v765 = vadd.f32 %v764, 1.0
  %v766 = vmul.f32 %v765, %v601
  %v767 = vand.u32 2147483647, %v601
  %vm768 = vcmp.lt.f32.partialorder %v767, 0.0004427343
  %v769 = vsel %vm768, %v766, %v763
  %v770 = vadd.f32 %v602, 1.0
  %v771 = vlog2.pop %v770
  %v772 = vmul.f32 %v771, 0.6931472
  %v773 = vmul.f32 -0.5, %v602
  %v774 = vadd.f32 %v773, 1.0
  %v775 = vmul.f32 %v774, %v602
  %v776 = vand.u32 2147483647, %v602
  %vm777 = vcmp.lt.f32.partialorder %v776, 0.0004427343
  %v778 = vsel %vm777, %v775, %v772
  %v779 = vadd.f32 %v603, 1.0
  %v780 = vlog2.pop %v779
  %v781 = vmul.f32 %v780, 0.6931472
  %v782 = vmul.f32 -0.5, %v603
  %v783 = vadd.f32 %v782, 1.0
  %v784 = vmul.f32 %v783, %v603
  %v785 = vand.u32 2147483647, %v603
  %vm786 = vcmp.lt.f32.partialorder %v785, 0.0004427343
  %v787 = vsel %vm786, %v784, %v781
  %v788 = vadd.f32 %v604, 1.0
  %v789 = vlog2.pop %v788
  %v790 = vmul.f32 %v789, 0.6931472
  %v791 = vmul.f32 -0.5, %v604
  %v792 = vadd.f32 %v791, 1.0
  %v793 = vmul.f32 %v792, %v604
  %v794 = vand.u32 2147483647, %v604
  %vm795 = vcmp.lt.f32.partialorder %v794, 0.0004427343
  %v796 = vsel %vm795, %v793, %v790
  %v797 = vadd.f32 %v605, 1.0
  %v798 = vlog2.pop %v797
  %v799 = vmul.f32 %v798, 0.6931472
  %v800 = vmul.f32 -0.5, %v605
  %v801 = vadd.f32 %v800, 1.0
  %v802 = vmul.f32 %v801, %v605
  %v803 = vand.u32 2147483647, %v605
  %vm804 = vcmp.lt.f32.partialorder %v803, 0.0004427343
  %v805 = vsel %vm804, %v802, %v799
  %v806 = vadd.f32 %v606, 1.0
  %v807 = vlog2.pop %v806
  %v808 = vmul.f32 %v807, 0.6931472
  %v809 = vmul.f32 -0.5, %v606
  %v810 = vadd.f32 %v809, 1.0
  %v811 = vmul.f32 %v810, %v606
  %v812 = vand.u32 2147483647, %v606
  %vm813 = vcmp.lt.f32.partialorder %v812, 0.0004427343
  %v814 = vsel %vm813, %v811, %v808
  %v815 = vadd.f32 %v607, 1.0
  %v816 = vlog2.pop %v815
  %v817 = vmul.f32 %v816, 0.6931472
  %v818 = vmul.f32 -0.5, %v607
  %v819 = vadd.f32 %v818, 1.0
  %v820 = vmul.f32 %v819, %v607
  %v821 = vand.u32 2147483647, %v607
  %vm822 = vcmp.lt.f32.partialorder %v821, 0.0004427343
  %v823 = vsel %vm822, %v820, %v817
  %v824 = vadd.f32 %v608, 1.0
  %v825 = vlog2.pop %v824
  %v826 = vmul.f32 %v825, 0.6931472
  %v827 = vmul.f32 -0.5, %v608
  %v828 = vadd.f32 %v827, 1.0
  %v829 = vmul.f32 %v828, %v608
  %v830 = vand.u32 2147483647, %v608
  %vm831 = vcmp.lt.f32.partialorder %v830, 0.0004427343
  %v832 = vsel %vm831, %v829, %v826
  %v833 = vadd.f32 %v609, 1.0
  %v834 = vlog2.pop %v833
  %v835 = vmul.f32 %v834, 0.6931472
  %v836 = vmul.f32 -0.5, %v609
  %v837 = vadd.f32 %v836, 1.0
  %v838 = vmul.f32 %v837, %v609
  %v839 = vand.u32 2147483647, %v609
  %vm840 = vcmp.lt.f32.partialorder %v839, 0.0004427343
  %v841 = vsel %vm840, %v838, %v835
  %v842 = vadd.f32 %v610, 1.0
  %v843 = vlog2.pop %v842
  %v844 = vmul.f32 %v843, 0.6931472
  %v845 = vmul.f32 -0.5, %v610
  %v846 = vadd.f32 %v845, 1.0
  %v847 = vmul.f32 %v846, %v610
  %v848 = vand.u32 2147483647, %v610
  %vm849 = vcmp.lt.f32.partialorder %v848, 0.0004427343
  %v850 = vsel %vm849, %v847, %v844
  %v851 = vadd.f32 %v611, 1.0
  %v852 = vlog2.pop %v851
  %v853 = vmul.f32 %v852, 0.6931472
  %v854 = vmul.f32 -0.5, %v611
  %v855 = vadd.f32 %v854, 1.0
  %v856 = vmul.f32 %v855, %v611
  %v857 = vand.u32 2147483647, %v611
  %vm858 = vcmp.lt.f32.partialorder %v857, 0.0004427343
  %v859 = vsel %vm858, %v856, %v853
  %v860 = vadd.f32 %v612, 1.0
  %v861 = vlog2.pop %v860
  %v862 = vmul.f32 %v861, 0.6931472
  %v863 = vmul.f32 -0.5, %v612
  %v864 = vadd.f32 %v863, 1.0
  %v865 = vmul.f32 %v864, %v612
  %v866 = vand.u32 2147483647, %v612
  %vm867 = vcmp.lt.f32.partialorder %v866, 0.0004427343
  %v868 = vsel %vm867, %v865, %v862
  %v869 = vadd.f32 %v613, 1.0
  %v870 = vlog2.pop %v869
  %v871 = vmul.f32 %v870, 0.6931472
  %v872 = vmul.f32 -0.5, %v613
  %v873 = vadd.f32 %v872, 1.0
  %v874 = vmul.f32 %v873, %v613
  %v875 = vand.u32 2147483647, %v613
  %vm876 = vcmp.lt.f32.partialorder %v875, 0.0004427343
  %v877 = vsel %vm876, %v874, %v871
  %v878 = vadd.f32 %v614, 1.0
  %v879 = vlog2.pop %v878
  %v880 = vmul.f32 %v879, 0.6931472
  %v881 = vmul.f32 -0.5, %v614
  %v882 = vadd.f32 %v881, 1.0
  %v883 = vmul.f32 %v882, %v614
  %v884 = vand.u32 2147483647, %v614
  %vm885 = vcmp.lt.f32.partialorder %v884, 0.0004427343
  %v886 = vsel %vm885, %v883, %v880
  %v887 = vadd.f32 %v615, 1.0
  %v888 = vlog2.pop %v887
  %v889 = vmul.f32 %v888, 0.6931472
  %v890 = vmul.f32 -0.5, %v615
  %v891 = vadd.f32 %v890, 1.0
  %v892 = vmul.f32 %v891, %v615
  %v893 = vand.u32 2147483647, %v615
  %vm894 = vcmp.lt.f32.partialorder %v893, 0.0004427343
  %v895 = vsel %vm894, %v892, %v889
  %v896 = vadd.f32 %v616, 1.0
  %v897 = vlog2.pop %v896
  %v898 = vmul.f32 %v897, 0.6931472
  %v899 = vmul.f32 -0.5, %v616
  %v900 = vadd.f32 %v899, 1.0
  %v901 = vmul.f32 %v900, %v616
  %v902 = vand.u32 2147483647, %v616
  %vm903 = vcmp.lt.f32.partialorder %v902, 0.0004427343
  %v904 = vsel %vm903, %v901, %v898
  %v905 = vsub.f32 0.0, %v585
  %v906 = vsub.f32 0.0, %v586
  %v907 = vsub.f32 0.0, %v587
  %v908 = vsub.f32 0.0, %v588
  %v909 = vsub.f32 0.0, %v589
  %v910 = vsub.f32 0.0, %v590
  %v911 = vsub.f32 0.0, %v591
  %v912 = vsub.f32 0.0, %v592
  %v913 = vsub.f32 0.0, %v593
  %v914 = vsub.f32 0.0, %v594
  %v915 = vsub.f32 0.0, %v595
  %v916 = vsub.f32 0.0, %v596
  %v917 = vsub.f32 0.0, %v597
  %v918 = vsub.f32 0.0, %v598
  %v919 = vsub.f32 0.0, %v599
  %v920 = vsub.f32 0.0, %v600
  %v921 = vsub.f32 0.0, %v601
  %v922 = vsub.f32 0.0, %v602
  %v923 = vsub.f32 0.0, %v603
  %v924 = vsub.f32 0.0, %v604
  %v925 = vsub.f32 0.0, %v605
  %v926 = vsub.f32 0.0, %v606
  %v927 = vsub.f32 0.0, %v607
  %v928 = vsub.f32 0.0, %v608
  %v929 = vsub.f32 0.0, %v609
  %v930 = vsub.f32 0.0, %v610
  %v931 = vsub.f32 0.0, %v611
  %v932 = vsub.f32 0.0, %v612
  %v933 = vsub.f32 0.0, %v613
  %v934 = vsub.f32 0.0, %v614
  %v935 = vsub.f32 0.0, %v615
  %v936 = vsub.f32 0.0, %v616
  %v937 = vadd.f32 %v905, 1.0
  %v938 = vlog2.pop %v937
  %v939 = vmul.f32 %v938, 0.6931472
  %v940 = vmul.f32 -0.5, %v905
  %v941 = vadd.f32 %v940, 1.0
  %v942 = vmul.f32 %v941, %v905
  %v943 = vand.u32 2147483647, %v905
  %vm944 = vcmp.lt.f32.partialorder %v943, 0.0004427343
  %v945 = vsel %vm944, %v942, %v939
  %v946 = vadd.f32 %v906, 1.0
  %v947 = vlog2.pop %v946
  %v948 = vmul.f32 %v947, 0.6931472
  %v949 = vmul.f32 -0.5, %v906
  %v950 = vadd.f32 %v949, 1.0
  %v951 = vmul.f32 %v950, %v906
  %v952 = vand.u32 2147483647, %v906
  %vm953 = vcmp.lt.f32.partialorder %v952, 0.0004427343
  %v954 = vsel %vm953, %v951, %v948
  %v955 = vadd.f32 %v907, 1.0
  %v956 = vlog2.pop %v955
  %v957 = vmul.f32 %v956, 0.6931472
  %v958 = vmul.f32 -0.5, %v907
  %v959 = vadd.f32 %v958, 1.0
  %v960 = vmul.f32 %v959, %v907
  %v961 = vand.u32 2147483647, %v907
  %vm962 = vcmp.lt.f32.partialorder %v961, 0.0004427343
  %v963 = vsel %vm962, %v960, %v957
  %v964 = vadd.f32 %v908, 1.0
  %v965 = vlog2.pop %v964
  %v966 = vmul.f32 %v965, 0.6931472
  %v967 = vmul.f32 -0.5, %v908
  %v968 = vadd.f32 %v967, 1.0
  %v969 = vmul.f32 %v968, %v908
  %v970 = vand.u32 2147483647, %v908
  %vm971 = vcmp.lt.f32.partialorder %v970, 0.0004427343
  %v972 = vsel %vm971, %v969, %v966
  %v973 = vadd.f32 %v909, 1.0
  %v974 = vlog2.pop %v973
  %v975 = vmul.f32 %v974, 0.6931472
  %v976 = vmul.f32 -0.5, %v909
  %v977 = vadd.f32 %v976, 1.0
  %v978 = vmul.f32 %v977, %v909
  %v979 = vand.u32 2147483647, %v909
  %vm980 = vcmp.lt.f32.partialorder %v979, 0.0004427343
  %v981 = vsel %vm980, %v978, %v975
  %v982 = vadd.f32 %v910, 1.0
  %v983 = vlog2.pop %v982
  %v984 = vmul.f32 %v983, 0.6931472
  %v985 = vmul.f32 -0.5, %v910
  %v986 = vadd.f32 %v985, 1.0
  %v987 = vmul.f32 %v986, %v910
  %v988 = vand.u32 2147483647, %v910
  %vm989 = vcmp.lt.f32.partialorder %v988, 0.0004427343
  %v990 = vsel %vm989, %v987, %v984
  %v991 = vadd.f32 %v911, 1.0
  %v992 = vlog2.pop %v991
  %v993 = vmul.f32 %v992, 0.6931472
  %v994 = vmul.f32 -0.5, %v911
  %v995 = vadd.f32 %v994, 1.0
  %v996 = vmul.f32 %v995, %v911
  %v997 = vand.u32 2147483647, %v911
  %vm998 = vcmp.lt.f32.partialorder %v997, 0.0004427343
  %v999 = vsel %vm998, %v996, %v993
  %v1000 = vadd.f32 %v912, 1.0
  %v1001 = vlog2.pop %v1000
  %v1002 = vmul.f32 %v1001, 0.6931472
  %v1003 = vmul.f32 -0.5, %v912
  %v1004 = vadd.f32 %v1003, 1.0
  %v1005 = vmul.f32 %v1004, %v912
  %v1006 = vand.u32 2147483647, %v912
  %vm1007 = vcmp.lt.f32.partialorder %v1006, 0.0004427343
  %v1008 = vsel %vm1007, %v1005, %v1002
  %v1009 = vadd.f32 %v913, 1.0
  %v1010 = vlog2.pop %v1009
  %v1011 = vmul.f32 %v1010, 0.6931472
  %v1012 = vmul.f32 -0.5, %v913
  %v1013 = vadd.f32 %v1012, 1.0
  %v1014 = vmul.f32 %v1013, %v913
  %v1015 = vand.u32 2147483647, %v913
  %vm1016 = vcmp.lt.f32.partialorder %v1015, 0.0004427343
  %v1017 = vsel %vm1016, %v1014, %v1011
  %v1018 = vadd.f32 %v914, 1.0
  %v1019 = vlog2.pop %v1018
  %v1020 = vmul.f32 %v1019, 0.6931472
  %v1021 = vmul.f32 -0.5, %v914
  %v1022 = vadd.f32 %v1021, 1.0
  %v1023 = vmul.f32 %v1022, %v914
  %v1024 = vand.u32 2147483647, %v914
  %vm1025 = vcmp.lt.f32.partialorder %v1024, 0.0004427343
  %v1026 = vsel %vm1025, %v1023, %v1020
  %v1027 = vadd.f32 %v915, 1.0
  %v1028 = vlog2.pop %v1027
  %v1029 = vmul.f32 %v1028, 0.6931472
  %v1030 = vmul.f32 -0.5, %v915
  %v1031 = vadd.f32 %v1030, 1.0
  %v1032 = vmul.f32 %v1031, %v915
  %v1033 = vand.u32 2147483647, %v915
  %vm1034 = vcmp.lt.f32.partialorder %v1033, 0.0004427343
  %v1035 = vsel %vm1034, %v1032, %v1029
  %v1036 = vadd.f32 %v916, 1.0
  %v1037 = vlog2.pop %v1036
  %v1038 = vmul.f32 %v1037, 0.6931472
  %v1039 = vmul.f32 -0.5, %v916
  %v1040 = vadd.f32 %v1039, 1.0
  %v1041 = vmul.f32 %v1040, %v916
  %v1042 = vand.u32 2147483647, %v916
  %vm1043 = vcmp.lt.f32.partialorder %v1042, 0.0004427343
  %v1044 = vsel %vm1043, %v1041, %v1038
  %v1045 = vadd.f32 %v917, 1.0
  %v1046 = vlog2.pop %v1045
  %v1047 = vmul.f32 %v1046, 0.6931472
  %v1048 = vmul.f32 -0.5, %v917
  %v1049 = vadd.f32 %v1048, 1.0
  %v1050 = vmul.f32 %v1049, %v917
  %v1051 = vand.u32 2147483647, %v917
  %vm1052 = vcmp.lt.f32.partialorder %v1051, 0.0004427343
  %v1053 = vsel %vm1052, %v1050, %v1047
  %v1054 = vadd.f32 %v918, 1.0
  %v1055 = vlog2.pop %v1054
  %v1056 = vmul.f32 %v1055, 0.6931472
  %v1057 = vmul.f32 -0.5, %v918
  %v1058 = vadd.f32 %v1057, 1.0
  %v1059 = vmul.f32 %v1058, %v918
  %v1060 = vand.u32 2147483647, %v918
  %vm1061 = vcmp.lt.f32.partialorder %v1060, 0.0004427343
  %v1062 = vsel %vm1061, %v1059, %v1056
  %v1063 = vadd.f32 %v919, 1.0
  %v1064 = vlog2.pop %v1063
  %v1065 = vmul.f32 %v1064, 0.6931472
  %v1066 = vmul.f32 -0.5, %v919
  %v1067 = vadd.f32 %v1066, 1.0
  %v1068 = vmul.f32 %v1067, %v919
  %v1069 = vand.u32 2147483647, %v919
  %vm1070 = vcmp.lt.f32.partialorder %v1069, 0.0004427343
  %v1071 = vsel %vm1070, %v1068, %v1065
  %v1072 = vadd.f32 %v920, 1.0
  %v1073 = vlog2.pop %v1072
  %v1074 = vmul.f32 %v1073, 0.6931472
  %v1075 = vmul.f32 -0.5, %v920
  %v1076 = vadd.f32 %v1075, 1.0
  %v1077 = vmul.f32 %v1076, %v920
  %v1078 = vand.u32 2147483647, %v920
  %vm1079 = vcmp.lt.f32.partialorder %v1078, 0.0004427343
  %v1080 = vsel %vm1079, %v1077, %v1074
  %v1081 = vadd.f32 %v921, 1.0
  %v1082 = vlog2.pop %v1081
  %v1083 = vmul.f32 %v1082, 0.6931472
  %v1084 = vmul.f32 -0.5, %v921
  %v1085 = vadd.f32 %v1084, 1.0
  %v1086 = vmul.f32 %v1085, %v921
  %v1087 = vand.u32 2147483647, %v921
  %vm1088 = vcmp.lt.f32.partialorder %v1087, 0.0004427343
  %v1089 = vsel %vm1088, %v1086, %v1083
  %v1090 = vadd.f32 %v922, 1.0
  %v1091 = vlog2.pop %v1090
  %v1092 = vmul.f32 %v1091, 0.6931472
  %v1093 = vmul.f32 -0.5, %v922
  %v1094 = vadd.f32 %v1093, 1.0
  %v1095 = vmul.f32 %v1094, %v922
  %v1096 = vand.u32 2147483647, %v922
  %vm1097 = vcmp.lt.f32.partialorder %v1096, 0.0004427343
  %v1098 = vsel %vm1097, %v1095, %v1092
  %v1099 = vadd.f32 %v923, 1.0
  %v1100 = vlog2.pop %v1099
  %v1101 = vmul.f32 %v1100, 0.6931472
  %v1102 = vmul.f32 -0.5, %v923
  %v1103 = vadd.f32 %v1102, 1.0
  %v1104 = vmul.f32 %v1103, %v923
  %v1105 = vand.u32 2147483647, %v923
  %vm1106 = vcmp.lt.f32.partialorder %v1105, 0.0004427343
  %v1107 = vsel %vm1106, %v1104, %v1101
  %v1108 = vadd.f32 %v924, 1.0
  %v1109 = vlog2.pop %v1108
  %v1110 = vmul.f32 %v1109, 0.6931472
  %v1111 = vmul.f32 -0.5, %v924
  %v1112 = vadd.f32 %v1111, 1.0
  %v1113 = vmul.f32 %v1112, %v924
  %v1114 = vand.u32 2147483647, %v924
  %vm1115 = vcmp.lt.f32.partialorder %v1114, 0.0004427343
  %v1116 = vsel %vm1115, %v1113, %v1110
  %v1117 = vadd.f32 %v925, 1.0
  %v1118 = vlog2.pop %v1117
  %v1119 = vmul.f32 %v1118, 0.6931472
  %v1120 = vmul.f32 -0.5, %v925
  %v1121 = vadd.f32 %v1120, 1.0
  %v1122 = vmul.f32 %v1121, %v925
  %v1123 = vand.u32 2147483647, %v925
  %vm1124 = vcmp.lt.f32.partialorder %v1123, 0.0004427343
  %v1125 = vsel %vm1124, %v1122, %v1119
  %v1126 = vadd.f32 %v926, 1.0
  %v1127 = vlog2.pop %v1126
  %v1128 = vmul.f32 %v1127, 0.6931472
  %v1129 = vmul.f32 -0.5, %v926
  %v1130 = vadd.f32 %v1129, 1.0
  %v1131 = vmul.f32 %v1130, %v926
  %v1132 = vand.u32 2147483647, %v926
  %vm1133 = vcmp.lt.f32.partialorder %v1132, 0.0004427343
  %v1134 = vsel %vm1133, %v1131, %v1128
  %v1135 = vadd.f32 %v927, 1.0
  %v1136 = vlog2.pop %v1135
  %v1137 = vmul.f32 %v1136, 0.6931472
  %v1138 = vmul.f32 -0.5, %v927
  %v1139 = vadd.f32 %v1138, 1.0
  %v1140 = vmul.f32 %v1139, %v927
  %v1141 = vand.u32 2147483647, %v927
  %vm1142 = vcmp.lt.f32.partialorder %v1141, 0.0004427343
  %v1143 = vsel %vm1142, %v1140, %v1137
  %v1144 = vadd.f32 %v928, 1.0
  %v1145 = vlog2.pop %v1144
  %v1146 = vmul.f32 %v1145, 0.6931472
  %v1147 = vmul.f32 -0.5, %v928
  %v1148 = vadd.f32 %v1147, 1.0
  %v1149 = vmul.f32 %v1148, %v928
  %v1150 = vand.u32 2147483647, %v928
  %vm1151 = vcmp.lt.f32.partialorder %v1150, 0.0004427343
  %v1152 = vsel %vm1151, %v1149, %v1146
  %v1153 = vadd.f32 %v929, 1.0
  %v1154 = vlog2.pop %v1153
  %v1155 = vmul.f32 %v1154, 0.6931472
  %v1156 = vmul.f32 -0.5, %v929
  %v1157 = vadd.f32 %v1156, 1.0
  %v1158 = vmul.f32 %v1157, %v929
  %v1159 = vand.u32 2147483647, %v929
  %vm1160 = vcmp.lt.f32.partialorder %v1159, 0.0004427343
  %v1161 = vsel %vm1160, %v1158, %v1155
  %v1162 = vadd.f32 %v930, 1.0
  %v1163 = vlog2.pop %v1162
  %v1164 = vmul.f32 %v1163, 0.6931472
  %v1165 = vmul.f32 -0.5, %v930
  %v1166 = vadd.f32 %v1165, 1.0
  %v1167 = vmul.f32 %v1166, %v930
  %v1168 = vand.u32 2147483647, %v930
  %vm1169 = vcmp.lt.f32.partialorder %v1168, 0.0004427343
  %v1170 = vsel %vm1169, %v1167, %v1164
  %v1171 = vadd.f32 %v931, 1.0
  %v1172 = vlog2.pop %v1171
  %v1173 = vmul.f32 %v1172, 0.6931472
  %v1174 = vmul.f32 -0.5, %v931
  %v1175 = vadd.f32 %v1174, 1.0
  %v1176 = vmul.f32 %v1175, %v931
  %v1177 = vand.u32 2147483647, %v931
  %vm1178 = vcmp.lt.f32.partialorder %v1177, 0.0004427343
  %v1179 = vsel %vm1178, %v1176, %v1173
  %v1180 = vadd.f32 %v932, 1.0
  %v1181 = vlog2.pop %v1180
  %v1182 = vmul.f32 %v1181, 0.6931472
  %v1183 = vmul.f32 -0.5, %v932
  %v1184 = vadd.f32 %v1183, 1.0
  %v1185 = vmul.f32 %v1184, %v932
  %v1186 = vand.u32 2147483647, %v932
  %vm1187 = vcmp.lt.f32.partialorder %v1186, 0.0004427343
  %v1188 = vsel %vm1187, %v1185, %v1182
  %v1189 = vadd.f32 %v933, 1.0
  %v1190 = vlog2.pop %v1189
  %v1191 = vmul.f32 %v1190, 0.6931472
  %v1192 = vmul.f32 -0.5, %v933
  %v1193 = vadd.f32 %v1192, 1.0
  %v1194 = vmul.f32 %v1193, %v933
  %v1195 = vand.u32 2147483647, %v933
  %vm1196 = vcmp.lt.f32.partialorder %v1195, 0.0004427343
  %v1197 = vsel %vm1196, %v1194, %v1191
  %v1198 = vadd.f32 %v934, 1.0
  %v1199 = vlog2.pop %v1198
  %v1200 = vmul.f32 %v1199, 0.6931472
  %v1201 = vmul.f32 -0.5, %v934
  %v1202 = vadd.f32 %v1201, 1.0
  %v1203 = vmul.f32 %v1202, %v934
  %v1204 = vand.u32 2147483647, %v934
  %vm1205 = vcmp.lt.f32.partialorder %v1204, 0.0004427343
  %v1206 = vsel %vm1205, %v1203, %v1200
  %v1207 = vadd.f32 %v935, 1.0
  %v1208 = vlog2.pop %v1207
  %v1209 = vmul.f32 %v1208, 0.6931472
  %v1210 = vmul.f32 -0.5, %v935
  %v1211 = vadd.f32 %v1210, 1.0
  %v1212 = vmul.f32 %v1211, %v935
  %v1213 = vand.u32 2147483647, %v935
  %vm1214 = vcmp.lt.f32.partialorder %v1213, 0.0004427343
  %v1215 = vsel %vm1214, %v1212, %v1209
  %v1216 = vadd.f32 %v936, 1.0
  %v1217 = vlog2.pop %v1216
  %v1218 = vmul.f32 %v1217, 0.6931472
  %v1219 = vmul.f32 -0.5, %v936
  %v1220 = vadd.f32 %v1219, 1.0
  %v1221 = vmul.f32 %v1220, %v936
  %v1222 = vand.u32 2147483647, %v936
  %vm1223 = vcmp.lt.f32.partialorder %v1222, 0.0004427343
  %v1224 = vsel %vm1223, %v1221, %v1218
  %v1225 = vsub.f32 %v625, %v945
  %v1226 = vsub.f32 %v634, %v954
  %v1227 = vsub.f32 %v643, %v963
  %v1228 = vsub.f32 %v652, %v972
  %v1229 = vsub.f32 %v661, %v981
  %v1230 = vsub.f32 %v670, %v990
  %v1231 = vsub.f32 %v679, %v999
  %v1232 = vsub.f32 %v688, %v1008
  %v1233 = vsub.f32 %v697, %v1017
  %v1234 = vsub.f32 %v706, %v1026
  %v1235 = vsub.f32 %v715, %v1035
  %v1236 = vsub.f32 %v724, %v1044
  %v1237 = vsub.f32 %v733, %v1053
  %v1238 = vsub.f32 %v742, %v1062
  %v1239 = vsub.f32 %v751, %v1071
  %v1240 = vsub.f32 %v760, %v1080
  %v1241 = vsub.f32 %v769, %v1089
  %v1242 = vsub.f32 %v778, %v1098
  %v1243 = vsub.f32 %v787, %v1107
  %v1244 = vsub.f32 %v796, %v1116
  %v1245 = vsub.f32 %v805, %v1125
  %v1246 = vsub.f32 %v814, %v1134
  %v1247 = vsub.f32 %v823, %v1143
  %v1248 = vsub.f32 %v832, %v1152
  %v1249 = vsub.f32 %v841, %v1161
  %v1250 = vsub.f32 %v850, %v1170
  %v1251 = vsub.f32 %v859, %v1179
  %v1252 = vsub.f32 %v868, %v1188
  %v1253 = vsub.f32 %v877, %v1197
  %v1254 = vsub.f32 %v886, %v1206
  %v1255 = vsub.f32 %v895, %v1215
  %v1256 = vsub.f32 %v904, %v1224
  %v1257 = vmul.f32 %v1225, 0.5
  %v1258 = vmul.f32 %v1226, 0.5
  %v1259 = vmul.f32 %v1227, 0.5
  %v1260 = vmul.f32 %v1228, 0.5
  %v1261 = vmul.f32 %v1229, 0.5
  %v1262 = vmul.f32 %v1230, 0.5
  %v1263 = vmul.f32 %v1231, 0.5
  %v1264 = vmul.f32 %v1232, 0.5
  %v1265 = vmul.f32 %v1233, 0.5
  %v1266 = vmul.f32 %v1234, 0.5
  %v1267 = vmul.f32 %v1235, 0.5
  %v1268 = vmul.f32 %v1236, 0.5
  %v1269 = vmul.f32 %v1237, 0.5
  %v1270 = vmul.f32 %v1238, 0.5
  %v1271 = vmul.f32 %v1239, 0.5
  %v1272 = vmul.f32 %v1240, 0.5
  %v1273 = vmul.f32 %v1241, 0.5
  %v1274 = vmul.f32 %v1242, 0.5
  %v1275 = vmul.f32 %v1243, 0.5
  %v1276 = vmul.f32 %v1244, 0.5
  %v1277 = vmul.f32 %v1245, 0.5
  %v1278 = vmul.f32 %v1246, 0.5
  %v1279 = vmul.f32 %v1247, 0.5
  %v1280 = vmul.f32 %v1248, 0.5
  %v1281 = vmul.f32 %v1249, 0.5
  %v1282 = vmul.f32 %v1250, 0.5
  %v1283 = vmul.f32 %v1251, 0.5
  %v1284 = vmul.f32 %v1252, 0.5
  %v1285 = vmul.f32 %v1253, 0.5
  %v1286 = vmul.f32 %v1254, 0.5
  %v1287 = vmul.f32 %v1255, 0.5
  %v1288 = vmul.f32 %v1256, 0.5
  %v1289 = vmul.f32 %v1257, %v210
  %v1290 = vmul.f32 %v1258, %v220
  %v1291 = vmul.f32 %v1259, %v230
  %v1292 = vmul.f32 %v1260, %v240
  %v1293 = vmul.f32 %v1261, %v250
  %v1294 = vmul.f32 %v1262, %v260
  %v1295 = vmul.f32 %v1263, %v270
  %v1296 = vmul.f32 %v1264, %v280
  %v1297 = vmul.f32 %v1265, %v290
  %v1298 = vmul.f32 %v1266, %v300
  %v1299 = vmul.f32 %v1267, %v310
  %v1300 = vmul.f32 %v1268, %v320
  %v1301 = vmul.f32 %v1269, %v330
  %v1302 = vmul.f32 %v1270, %v340
  %v1303 = vmul.f32 %v1271, %v350
  %v1304 = vmul.f32 %v1272, %v360
  %v1305 = vmul.f32 %v1273, %v370
  %v1306 = vmul.f32 %v1274, %v380
  %v1307 = vmul.f32 %v1275, %v390
  %v1308 = vmul.f32 %v1276, %v400
  %v1309 = vmul.f32 %v1277, %v410
  %v1310 = vmul.f32 %v1278, %v420
  %v1311 = vmul.f32 %v1279, %v430
  %v1312 = vmul.f32 %v1280, %v440
  %v1313 = vmul.f32 %v1281, %v450
  %v1314 = vmul.f32 %v1282, %v460
  %v1315 = vmul.f32 %v1283, %v470
  %v1316 = vmul.f32 %v1284, %v480
  %v1317 = vmul.f32 %v1285, %v490
  %v1318 = vmul.f32 %v1286, %v500
  %v1319 = vmul.f32 %v1287, %v510
  %v1320 = vmul.f32 %v1288, %v520
  %v1321 = vmul.f32 %v1289, %v8
  %v1322 = vmul.f32 %v1290, %v9
  %v1323 = vmul.f32 %v1291, %v10
  %v1324 = vmul.f32 %v1292, %v11
  %v1325 = vmul.f32 %v1293, %v12
  %v1326 = vmul.f32 %v1294, %v13
  %v1327 = vmul.f32 %v1295, %v14
  %v1328 = vmul.f32 %v1296, %v15
  %v1329 = vmul.f32 %v1297, %v16
  %v1330 = vmul.f32 %v1298, %v17
  %v1331 = vmul.f32 %v1299, %v18
  %v1332 = vmul.f32 %v1300, %v19
  %v1333 = vmul.f32 %v1301, %v20
  %v1334 = vmul.f32 %v1302, %v21
  %v1335 = vmul.f32 %v1303, %v22
  %v1336 = vmul.f32 %v1304, %v23
  %v1337 = vmul.f32 %v1305, %v24
  %v1338 = vmul.f32 %v1306, %v25
  %v1339 = vmul.f32 %v1307, %v26
  %v1340 = vmul.f32 %v1308, %v27
  %v1341 = vmul.f32 %v1309, %v28
  %v1342 = vmul.f32 %v1310, %v29
  %v1343 = vmul.f32 %v1311, %v30
  %v1344 = vmul.f32 %v1312, %v31
  %v1345 = vmul.f32 %v1313, %v32
  %v1346 = vmul.f32 %v1314, %v33
  %v1347 = vmul.f32 %v1315, %v34
  %v1348 = vmul.f32 %v1316, %v35
  %v1349 = vmul.f32 %v1317, %v36
  %v1350 = vmul.f32 %v1318, %v37
  %v1351 = vmul.f32 %v1319, %v38
  %v1352 = vmul.f32 %v1320, %v39
  %1353 = vst.msk [vmem:[%s1] sm:$0xff] %vm72, %v1321
  %1354 = vst.msk [vmem:[%s1 + $0x8] sm:$0xff] %vm72, %v1322
  %1355 = vst.msk [vmem:[%s1 + $0x10] sm:$0xff] %vm72, %v1323
  %1356 = vst.msk [vmem:[%s1 + $0x18] sm:$0xff] %vm72, %v1324
  %1357 = vst.msk [vmem:[%s1 + $0x20] sm:$0xff] %vm72, %v1325
  %1358 = vst.msk [vmem:[%s1 + $0x28] sm:$0xff] %vm72, %v1326
  %1359 = vst.msk [vmem:[%s1 + $0x30] sm:$0xff] %vm72, %v1327
  %1360 = vst.msk [vmem:[%s1 + $0x38] sm:$0xff] %vm72, %v1328
  %1361 = vst.msk [vmem:[%s1 + $0x40] sm:$0xff] %vm72, %v1329
  %1362 = vst.msk [vmem:[%s1 + $0x48] sm:$0xff] %vm72, %v1330
  %1363 = vst.msk [vmem:[%s1 + $0x50] sm:$0xff] %vm72, %v1331
  %1364 = vst.msk [vmem:[%s1 + $0x58] sm:$0xff] %vm72, %v1332
  %1365 = vst.msk [vmem:[%s1 + $0x60] sm:$0xff] %vm72, %v1333
  %1366 = vst.msk [vmem:[%s1 + $0x68] sm:$0xff] %vm72, %v1334
  %1367 = vst.msk [vmem:[%s1 + $0x70] sm:$0xff] %vm72, %v1335
  %1368 = vst.msk [vmem:[%s1 + $0x78] sm:$0xff] %vm72, %v1336
  %1369 = vst.msk [vmem:[%s1 + $0x80] sm:$0xff] %vm72, %v1337
  %1370 = vst.msk [vmem:[%s1 + $0x88] sm:$0xff] %vm72, %v1338
  %1371 = vst.msk [vmem:[%s1 + $0x90] sm:$0xff] %vm72, %v1339
  %1372 = vst.msk [vmem:[%s1 + $0x98] sm:$0xff] %vm72, %v1340
  %1373 = vst.msk [vmem:[%s1 + $0xa0] sm:$0xff] %vm72, %v1341
  %1374 = vst.msk [vmem:[%s1 + $0xa8] sm:$0xff] %vm72, %v1342
  %1375 = vst.msk [vmem:[%s1 + $0xb0] sm:$0xff] %vm72, %v1343
  %1376 = vst.msk [vmem:[%s1 + $0xb8] sm:$0xff] %vm72, %v1344
  %1377 = vst.msk [vmem:[%s1 + $0xc0] sm:$0xff] %vm72, %v1345
  %1378 = vst.msk [vmem:[%s1 + $0xc8] sm:$0xff] %vm72, %v1346
  %1379 = vst.msk [vmem:[%s1 + $0xd0] sm:$0xff] %vm72, %v1347
  %1380 = vst.msk [vmem:[%s1 + $0xd8] sm:$0xff] %vm72, %v1348
  %1381 = vst.msk [vmem:[%s1 + $0xe0] sm:$0xff] %vm72, %v1349
  %1382 = vst.msk [vmem:[%s1 + $0xe8] sm:$0xff] %vm72, %v1350
  %1383 = vst.msk [vmem:[%s1 + $0xf0] sm:$0xff] %vm72, %v1351
  %1384 = vst.msk [vmem:[%s1 + $0xf8] sm:$0xff] %vm72, %v1352
  // Predicated region
  $region6: #{tpu_custom_call.1} parent=0 // pred_check
    _
  $region7: #{tpu_custom_call.1} parent=0 // pred_check_branch
    %1386 = sbr.rel (0) target = $region9
  $region8: #{tpu_custom_call.1} parent=0 // pred_region
    _
  $region9: #{tpu_custom_call.1} parent=0 // pred_fallthru
    _
  // Predicated region
  $region10: #{tpu_custom_call.1} parent=0 // pred_check
    _
  $region11: #{tpu_custom_call.1} parent=0 // pred_check_branch
    %1388 = sbr.rel (0) target = $region13
  $region12: #{tpu_custom_call.1} parent=0 // pred_region
    _
  $region13: #{tpu_custom_call.1} parent=0 // pred_fallthru
    _

</llo_original>
